<compile_context>
chip_gen: v7x
topology: tpu7x:2x2x1
jax: 0.10.0
libtpu: 0.0.40
codegen_flags: <defaults>
</compile_context>

<pallas_src>
import functools
import math

import jax
import jax.numpy as jnp
from jax.experimental import pallas as pl
from jax.experimental.pallas import tpu as pltpu

# Keep kernel MXU matmuls and the pure-JAX reference at full f32 accuracy so the
# correctness check can use a tight-ish tolerance.
jax.config.update("jax_default_matmul_precision", "highest")

_LANES = 256        # padded lane width used throughout the kernel
_POOL_COLS = 110    # 11 channels * 10 pooled positions per sample
_FLAT_COLS = 231    # 21 * 11: the module's view(-1, 231) width


def _vmem_spec():
    return pl.BlockSpec(memory_space=pltpu.MemorySpace.VMEM)


# ----------------------------------------------------------------------------
# pltpu.roll direction probe (tiny kernel, run once at startup)
# ----------------------------------------------------------------------------
def _roll_probe_kernel(x_ref, o_ref):
    o_ref[...] = pltpu.roll(x_ref[...], 1, axis=1)


def roll_moves_to_higher_indices() -> bool:
    """True iff pltpu.roll(x, +1, axis) moves elements toward higher indices
    (i.e. matches jnp.roll's convention)."""
    x = jnp.arange(_LANES, dtype=jnp.float32).reshape(1, _LANES)
    y = pl.pallas_call(
        _roll_probe_kernel,
        out_shape=jax.ShapeDtypeStruct((1, _LANES), jnp.float32),
        in_specs=[_vmem_spec()],
        out_specs=_vmem_spec(),
    )(x)
    return float(y[0, 0]) == float(_LANES - 1)


# ----------------------------------------------------------------------------
# Fused forward kernel
#   conv(e/o) = x @ A_even/A_odd + b_row          (two MXU matmuls, lane-dense)
#   pooled    = max(conv_e, conv_o, 0)            (ReLU + MaxPool1d(2) fused)
#   flat      = view(-1, 231) regroup             (per-row roll + mask, scratch)
#   out       = relu(flat @ W1p + b1p) @ W2p + b2p
# ----------------------------------------------------------------------------
def _make_fused_kernel(roll_to_higher: bool):

    def rotate_src_to_dest(v, k):
        # Returns w with w[..., j] = v[..., (j + k) % _LANES] for either roll
        # sign convention (k is a static Python int).
        shift = (-k) % _LANES if roll_to_higher else k % _LANES
        if shift == 0:
            return v
        return pltpu.roll(v, shift, axis=1)

    def kernel(x_ref, ae_ref, ao_ref, cb_ref, w1_ref, b1_ref, w2_ref, b2_ref,
               o_ref, flat_ref):
        # --- Conv1d(1, 11, 2) + ReLU + MaxPool1d(2) --------------------------
        x = x_ref[...]                                              # (N, 22)
        conv_e = jnp.dot(x, ae_ref[...], preferred_element_type=jnp.float32)
        conv_o = jnp.dot(x, ao_ref[...], preferred_element_type=jnp.float32)
        bias = cb_ref[...]                                          # (1, 256)
        # pooled[n, c*10 + p] = max(relu(conv@2p), relu(conv@2p+1)); padded
        # lanes (>= 110) stay exactly 0 (zero weight/bias columns).
        pooled = jnp.maximum(jnp.maximum(conv_e + bias, conv_o + bias), 0.0)

        # --- view(-1, 231) regroup: flat[m, j] = pooled_flat[231*m + j] ------
        n = x_ref.shape[0]
        m_rows = (n * _POOL_COLS) // _FLAT_COLS
        lane = jax.lax.broadcasted_iota(jnp.int32, (1, _LANES), 1)
        for m in range(m_rows):
            n0 = 2 * m + m // 10          # first pooled row feeding flat row m
            a = 11 * (m % 10)             # starting column inside that row
            # flat row m = [pooled[n0, a:110] | pooled[n0+1, :] | pooled[n0+2, :a+11]]
            p1 = rotate_src_to_dest(pooled[n0:n0 + 1, :], a)
            p2 = rotate_src_to_dest(pooled[n0 + 1:n0 + 2, :], a - _POOL_COLS)
            p3 = rotate_src_to_dest(pooled[n0 + 2:n0 + 3, :], a - 2 * _POOL_COLS)
            row = jnp.where(
                lane < _POOL_COLS - a, p1,
                jnp.where(lane < 2 * _POOL_COLS - a, p2,
                          jnp.where(lane < _FLAT_COLS, p3, 0.0)))
            flat_ref[m:m + 1, :] = row    # aligned, full-width (1, 256) store

        # --- Linear(231,100) + ReLU + Linear(100,10); dropouts = identity ----
        flat = flat_ref[...]                                        # (M, 256)
        h = jnp.dot(flat, w1_ref[...], preferred_element_type=jnp.float32)
        h = jnp.maximum(h + b1_ref[...], 0.0)                       # (M, 128)
        o = jnp.dot(h, w2_ref[...], preferred_element_type=jnp.float32)
        o_ref[...] = o + b2_ref[...]                                # (M, 128)

    return kernel


# ----------------------------------------------------------------------------
# One-time parameter prep (not on the per-call critical path)
# ----------------------------------------------------------------------------
def prepare_params(conv_w, conv_b, fc1_w, fc1_b, fc2_w, fc2_b):
    f32 = jnp.float32
    w0 = conv_w[:, 0, 0].astype(f32)                     # (11,)
    w1 = conv_w[:, 0, 1].astype(f32)                     # (11,)
    cc, pp = jnp.meshgrid(jnp.arange(11), jnp.arange(10), indexing="ij")
    cc = cc.reshape(-1)
    pp = pp.reshape(-1)
    col = cc * 10 + pp                                   # output col = c*10 + p
    # A_even: conv at position 2p;  A_odd: conv at position 2p+1.
    ae = jnp.zeros((22, _LANES), f32)
    ae = ae.at[2 * pp, col].set(w0[cc]).at[2 * pp + 1, col].set(w1[cc])
    ao = jnp.zeros((22, _LANES), f32)
    ao = ao.at[2 * pp + 1, col].set(w0[cc]).at[2 * pp + 2, col].set(w1[cc])
    cb = jnp.zeros((1, _LANES), f32).at[0, col].set(conv_b.astype(f32)[cc])
    # Lane-aligned MLP weights (zero padded); real logits live in cols [0, 10).
    w1p = jnp.zeros((256, 128), f32).at[:231, :100].set(fc1_w.astype(f32))
    b1p = jnp.zeros((1, 128), f32).at[0, :100].set(fc1_b.astype(f32))
    w2p = jnp.zeros((128, 128), f32).at[:100, :10].set(fc2_w.astype(f32))
    b2p = jnp.zeros((1, 128), f32).at[0, :10].set(fc2_b.astype(f32))
    return dict(ae=ae, ao=ao, cb=cb, w1=w1p, b1=b1p, w2=w2p, b2=b2p)


# ----------------------------------------------------------------------------
# Forward (single pallas_call; only glue is the final 10-logit slice)
# ----------------------------------------------------------------------------
def frogs_cnn_forward(x, prep, *, roll_to_higher):
    x = jnp.reshape(x, (-1, 22)).astype(jnp.float32)     # == view(-1, 1, 22)
    n = x.shape[0]
    if n % 21 != 0:
        raise ValueError("batch must be a multiple of 21 (view(-1, 231) quirk)")
    m_rows = (n // 21) * 10
    out = pl.pallas_call(
        _make_fused_kernel(roll_to_higher),
        out_shape=jax.ShapeDtypeStruct((m_rows, 128), jnp.float32),
        in_specs=[_vmem_spec()] * 8,
        out_specs=_vmem_spec(),
        scratch_shapes=[pltpu.VMEM((m_rows, _LANES), jnp.float32)],
    )(x, prep["ae"], prep["ao"], prep["cb"],
      prep["w1"], prep["b1"], prep["w2"], prep["b2"])
    return out[:, :10]                                   # drop lane padding


# ----------------------------------------------------------------------------
# Pure-JAX reference (mirrors the PyTorch ops directly) for verification
# ----------------------------------------------------------------------------
def reference_forward(x, params):
    x = jnp.reshape(x, (-1, 22)).astype(jnp.float32)
    w, b = params["conv_w"], params["conv_b"]
    conv = (x[:, :21][:, None, :] * w[:, 0, 0][None, :, None]
            + x[:, 1:][:, None, :] * w[:, 0, 1][None, :, None]
            + b[None, :, None])                          # (N, 11, 21)
    conv = jnp.maximum(conv, 0.0)
    pooled = jnp.max(conv[:, :, :20].reshape(conv.shape[0], 11, 10, 2), axis=-1)
    flat = pooled.reshape(-1, 231)
    h = jnp.maximum(flat @ params["fc1_w"] + params["fc1_b"], 0.0)
    return h @ params["fc2_w"] + params["fc2_b"]


if __name__ == "__main__":
    key = jax.random.PRNGKey(0)
    kx, k1, k2, k3, k4, k5, k6 = jax.random.split(key, 7)

    def unif(k, shape, fan_in):
        bound = 1.0 / math.sqrt(fan_in)
        return jax.random.uniform(k, shape, jnp.float32, -bound, bound)

    # Deterministic synthetic parameters (PyTorch-default-style uniform init).
    # PyTorch Linear weights are (out, in); stored here transposed for x @ W.
    params = {
        "conv_w": unif(k1, (11, 1, 2), 2),      # Conv1d(1, 11, 2).weight
        "conv_b": unif(k2, (11,), 2),           # Conv1d bias
        "fc1_w": unif(k3, (231, 100), 231),     # Linear(231, 100).weight.T
        "fc1_b": unif(k4, (100,), 231),
        "fc2_w": unif(k5, (100, 10), 100),      # Linear(100, 10).weight.T
        "fc2_b": unif(k6, (10,), 100),
    }
    prep = prepare_params(params["conv_w"], params["conv_b"],
                          params["fc1_w"], params["fc1_b"],
                          params["fc2_w"], params["fc2_b"])

    # 21 samples of 22 MFCCs: conv/pool gives (21, 11, 10); the module's
    # view(-1, 231) regroups that into 10 MLP rows -> output (10, 10).
    x = jax.random.normal(kx, (21, 22), dtype=jnp.float32)

    rth = roll_moves_to_higher_indices()
    fwd = jax.jit(functools.partial(frogs_cnn_forward, roll_to_higher=rth))
    out = jax.block_until_ready(fwd(x, prep))
    ref = reference_forward(x, params)

    assert out.shape == (10, 10), out.shape
    # Tolerance leaves headroom for MXU matmul rounding-mode differences.
    assert bool(jnp.allclose(out, ref, atol=2e-3, rtol=2e-2)), "mismatch vs reference"
    print("KERNEL_OK")
</pallas_src>

<mosaic_0001>
module attributes {stable_mosaic.version = 11 : i64} {
  func.func @_roll_probe_kernel(%arg0: memref<1x256xf32, #tpu.memory_space<vmem>>, %arg1: memref<1x256xf32, #tpu.memory_space<vmem>>) attributes {dimension_semantics = [], scalar_prefetch = 0 : i64, scratch_operands = 0 : i64, tpu.core_type = #tpu.core_type<tc>} {
    %c0 = arith.constant 0 : index
    %c0_0 = arith.constant 0 : index
    %0 = vector.load %arg0[%c0, %c0_0] : memref<1x256xf32, #tpu.memory_space<vmem>>, vector<1x256xf32>
    %c1_i32 = arith.constant 1 : i32
    %1 = tpu.dynamic_rotate %0 by %c1_i32 dim 1 : vector<1x256xf32>, i32 -> vector<1x256xf32>
    %c0_1 = arith.constant 0 : index
    %c0_2 = arith.constant 0 : index
    %2 = vector.load %arg1[%c0_1, %c0_2] : memref<1x256xf32, #tpu.memory_space<vmem>>, vector<1x256xf32>
    tpu.vector_store %arg1[%c0_1, %c0_2], %1 {strides = array<i32>} : memref<1x256xf32, #tpu.memory_space<vmem>>, vector<1x256xf32>,
    return
  }
}

</mosaic_0001>

<llo_original>
// kernel: tpu_custom_call.1
$region0: #{tpu_custom_call.1}
  #allocation0 [shape = 'u32[]', space=smem, size = 0x4, offset = 0x4, fixed_abs, tag = 'smem constant byte address 0x4 - core index']
  #allocation1 [shape = 'u32[144,128]{1,0:T(1,128)}', space=vmem, size = 0x12000, scoped, tag = 'internal scratch']
  %s0 = inlined_call_operand.hbm [shape: f32[1,256], index: 0, kind: input, shape index: {}]
  %s1 = inlined_call_operand.hbm [shape: f32[1,256], index: 1, kind: output, shape index: {}]
  %s2 = sld [smem:[#allocation0]]
  $region18: #{tpu_custom_call.1} parent=0
    _
  %s4 = ssub.s32 1, %s2
  %s5 = scalar_select 0, %s4, %s2
  $region1: #{tpu_custom_call.1} parent=0
    #allocation2 [shape = 'u8[1024]{0}', space=vmem, size = 0x400, scoped, tag = 'input window, operand 0, single buffered']
    #allocation3 [shape = 's32[1]{0}', space=sflag, size = 0x4, scoped, tag = 'scoped memory for tpu_custom_call.1']
    #allocation4 [shape = 's32[1]{0}', space=sflag, size = 0x4, scoped, tag = 'scoped memory for tpu_custom_call.1']
    #allocation5 [shape = 'u8[1024]{0}', space=vmem, size = 0x400, scoped, tag = 'output window, operand 0, single buffered']
    %6 = vsyncpa [#allocation3], 0
    %7 = vsyncpa [#allocation4], 0
    // Predicated region
    $region2: #{tpu_custom_call.1} parent=1 // pred_check
      _
    $region3: #{tpu_custom_call.1} parent=1 // pred_check_branch
      %9 = sbr.rel (0) target = $region5
    $region4: #{tpu_custom_call.1} parent=1 // pred_region
      %s11 = ssub.s32 32, 32
      %12 = vsyncadd [#allocation3], %s11
      %s14 = sshll.u32 [#allocation2], 4
      %s15 = int_to_ptr.vmem [resolvable:$true] %s14
      %17 = dma.hbm_to_vmem [thread:$0]  %s0, 32, %s15, [#allocation3]
    $region5: #{tpu_custom_call.1} parent=1 // pred_fallthru
      _
    // Predicated region
    $region6: #{tpu_custom_call.1} parent=1 // pred_check
      _
    $region7: #{tpu_custom_call.1} parent=1 // pred_check_branch
      %19 = sbr.rel (0) target = $region9
    $region8: #{tpu_custom_call.1} parent=1 // pred_region
      %20 = dma.done [#allocation3], 32
    $region9: #{tpu_custom_call.1} parent=1 // pred_fallthru
      _
    %v21 = vld [vmem:[#allocation2] sm:$0x3]
    %v23 = vlaneseq
    %v24 = vshrl.u32 %v23, 7
    %v25 = vsub.s32 0, %v24
    %v26 = vrot.slane %v21, %v25
    %v27 = vlaneseq
    %v28 = vshrl.u32 %v27, 7
    %v29 = vsub.s32 1, %v28
    %v30 = vrot.slane %v21, %v29
    %33 = vrot.lane.b32.xlu0 %v26, 1
    %v34 = vpop.permute.xlu0 %33
    %35 = vrot.lane.b32.xlu0 %v30, 1
    %v36 = vpop.permute.xlu0 %35
    %v37 = vlaneseq
    %v38 = vand.u32 %v37, 127
    %vm39 = vcmp.lt.s32.totalorder %v38, 1
    %v40 = vsel %vm39, %v34, %v36
    %v41 = vsel %vm39, %v36, %v34
    %v44 = vcombine.low %v41, %v40
    %v46 = vunpack.c.l.s4 1966171168
    %v47 = vunpack.c.0.s8 %v46
    %v48 = vlaneseq
    %v49 = vshrl.u32 %v48, 7
    %v50 = vsub.s32 %v47, %v49
    %v51 = vrot.slane %v44, %v50
    %v53 = vunpack.c.l.s4 1966171168
    %v54 = vunpack.c.0.s8 %v53
    %v55 = vlaneseq
    %v56 = vshrl.u32 %v55, 7
    %v57 = vsub.s32 %v54, %v56
    %v58 = vrot.slane %v51, %v57
    %v60 = vlaneseq
    %vm61 = vcmp.ge.s32.totalorder %v60, 0
    %vm62 = vcmp.lt.s32.totalorder %v60, 256
    %vm63 = vmand %vm61, %vm62
    %64 = vst.msk [vmem:[#allocation5] sm:$0x3] %vm63, %v58
    // Predicated region
    $region10: #{tpu_custom_call.1} parent=1 // pred_check
      _
    $region11: #{tpu_custom_call.1} parent=1 // pred_check_branch
      %66 = sbr.rel (0) target = $region13
    $region12: #{tpu_custom_call.1} parent=1 // pred_region
      %s68 = ssub.s32 32, 32
      %69 = vsyncadd [#allocation4], %s68
      %s71 = sshll.u32 [#allocation5], 4
      %s72 = int_to_ptr.vmem [resolvable:$true] %s71
      %74 = dma.vmem_to_hbm [thread:$0]  %s72, 32, %s1, [#allocation4]
    $region13: #{tpu_custom_call.1} parent=1 // pred_fallthru
      _
    // Predicated region
    $region14: #{tpu_custom_call.1} parent=1 // pred_check
      _
    $region15: #{tpu_custom_call.1} parent=1 // pred_check_branch
      %76 = sbr.rel (0) target = $region17
    $region16: #{tpu_custom_call.1} parent=1 // pred_region
      %77 = dma.done [#allocation4], 32
    $region17: #{tpu_custom_call.1} parent=1 // pred_fallthru
      _
    %78 = vsyncpa [#allocation3], 1
    %79 = vsyncpa [#allocation4], 1

</llo_original>
